<compile_context>
chip_gen: v6e
topology: v6e:2x2x1
jax: 0.10.0
libtpu: 0.0.40
codegen_flags: <defaults>
</compile_context>

<pallas_src>
import functools
import math

import jax
import jax.numpy as jnp
from jax.experimental import pallas as pl
from jax.experimental.pallas import tpu as pltpu

EMBEDDING_VECTOR_SIZE = 20
NUMBER_SIZE = 8

# Layer dims (in_features, out_features), matching the PyTorch module:
#   fc1: 8->4, fc2: 4->2, fc3: 2->20, fc5: 20->40, fc6: 40->4, fc7: 4->8
LAYER_DIMS = [
    (NUMBER_SIZE, NUMBER_SIZE // 2),                     # fc1
    (NUMBER_SIZE // 2, NUMBER_SIZE // 4),                # fc2
    (NUMBER_SIZE // 4, EMBEDDING_VECTOR_SIZE),           # fc3
    (EMBEDDING_VECTOR_SIZE, EMBEDDING_VECTOR_SIZE * 2),  # fc5
    (EMBEDDING_VECTOR_SIZE * 2, NUMBER_SIZE // 2),       # fc6
    (NUMBER_SIZE // 2, NUMBER_SIZE),                     # fc7
]


def _round_up(x, m):
    return ((x + m - 1) // m) * m


# Packed weight-slab geometry: each layer's (out, in) weight block starts at a
# sublane-aligned row offset (out padded to a multiple of 8 rows).
_PADDED_OUTS = [_round_up(out, 8) for (_, out) in LAYER_DIMS]   # 8, 8, 24, 40, 8, 8
_ROW_OFFSETS = [sum(_PADDED_OUTS[:i]) for i in range(len(LAYER_DIMS))]  # 0,8,16,40,80,88
_SLAB_ROWS = sum(_PADDED_OUTS)                                  # 96
_MAX_IN = max(fan_in for (fan_in, _) in LAYER_DIMS)             # 40


def _ae_kernel(x_ref, w_ref, b_ref, out_ref):
    """Fused forward pass for one transposed batch tile.

    x_ref:   (8, TB)  input tile, features on sublanes, batch on lanes.
    w_ref:   (96, 40) f32 packed weight slab; layer l lives at rows
             [_ROW_OFFSETS[l] : +out_l], cols [0 : in_l], stored as (out, in).
    b_ref:   (96, 1)  f32 packed bias column.
    out_ref: (8, TB)  output tile.
    """
    h = x_ref[...].astype(jnp.float32)               # (8, TB)
    n_layers = len(LAYER_DIMS)
    for idx, ((fan_in, fan_out), off) in enumerate(zip(LAYER_DIMS, _ROW_OFFSETS)):
        w = w_ref[off:off + fan_out, 0:fan_in].astype(jnp.bfloat16)  # (out, in)
        b = b_ref[off:off + fan_out, :]                              # (out, 1) f32
        # MXU: bf16 x bf16 -> f32 accumulate.  Batch stays on lanes (N dim).
        h = jnp.dot(w, h.astype(jnp.bfloat16),
                    preferred_element_type=jnp.float32) + b
        if idx < n_layers - 1:                       # no activation after fc7
            h = jnp.maximum(h, 0.0)
    out_ref[...] = h.astype(out_ref.dtype)


def init_params(key, dtype=jnp.float32):
    """PyTorch-style init: U(-1/sqrt(fan_in), 1/sqrt(fan_in)).

    Weights are returned in PyTorch layout (out_features, in_features), biases
    as (out_features,).  Weights are rounded through bf16 so the bf16-MXU
    kernel and the f32 reference use exactly the same weight values.
    """
    params = []
    for (fan_in, fan_out) in LAYER_DIMS:
        key, kw, kb = jax.random.split(key, 3)
        bound = 1.0 / math.sqrt(fan_in)
        w = jax.random.uniform(kw, (fan_out, fan_in), dtype=jnp.float32,
                               minval=-bound, maxval=bound)
        b = jax.random.uniform(kb, (fan_out,), dtype=jnp.float32,
                               minval=-bound, maxval=bound)
        w = w.astype(jnp.bfloat16).astype(dtype)     # bf16-representable
        params.append((w, b.astype(dtype)))
    return params


def _pack_params(params):
    """Pack the 6 (w, b) pairs into one weight slab + one bias column."""
    w_slab = jnp.zeros((_SLAB_ROWS, _MAX_IN), jnp.float32)
    b_slab = jnp.zeros((_SLAB_ROWS, 1), jnp.float32)
    for (w, b), off, (fan_in, fan_out) in zip(params, _ROW_OFFSETS, LAYER_DIMS):
        w_slab = w_slab.at[off:off + fan_out, :fan_in].set(w.astype(jnp.float32))
        b_slab = b_slab.at[off:off + fan_out, 0].set(b.astype(jnp.float32))
    return w_slab, b_slab


@functools.partial(jax.jit, static_argnames=("tile_b",))
def ae_nosecond_forward(x, params, tile_b=1024):
    """Fused AE_noSecond forward pass via pallas_call.

    x: (B, 8) float32.  The batch is transposed onto the lane axis and padded
    to a multiple of the lane tile (tile_b lanes per grid step, >=128).
    For large batches the default tile keeps >=2 parallel grid steps so both
    TensorCores on v7x are used.
    """
    B, F = x.shape
    assert F == NUMBER_SIZE

    # Lane tile: multiple of 128, no larger than needed for this batch.
    tile = _round_up(min(tile_b, _round_up(B, 128)), 128)
    padded_B = _round_up(B, tile)

    # (B, 8) -> lane-dense (8, padded_B)
    xt = jnp.pad(x.T, ((0, 0), (0, padded_B - B)))

    w_slab, b_slab = _pack_params(params)

    out_t = pl.pallas_call(
        _ae_kernel,
        out_shape=jax.ShapeDtypeStruct((NUMBER_SIZE, padded_B), x.dtype),
        grid=(padded_B // tile,),
        in_specs=[
            pl.BlockSpec((NUMBER_SIZE, tile), lambda i: (0, i)),
            pl.BlockSpec((_SLAB_ROWS, _MAX_IN), lambda i: (0, 0)),
            pl.BlockSpec((_SLAB_ROWS, 1), lambda i: (0, 0)),
        ],
        out_specs=pl.BlockSpec((NUMBER_SIZE, tile), lambda i: (0, i)),
        compiler_params=pltpu.CompilerParams(
            dimension_semantics=("parallel",)),
    )(xt, w_slab, b_slab)

    return out_t[:, :B].T


def ae_nosecond_reference(x, params):
    """Pure-JAX f32 reference (PyTorch-layout weights: y = x @ W.T + b)."""
    h = x
    n_layers = len(params)
    for idx, (w, b) in enumerate(params):
        h = h @ w.T + b
        if idx < n_layers - 1:
            h = jax.nn.relu(h)
    return h


if __name__ == "__main__":
    key = jax.random.PRNGKey(0)
    key, kx = jax.random.split(key)

    batch = 16  # small demo batch; the wrapper pads the lane axis to 128
    x = jax.random.normal(kx, (batch, NUMBER_SIZE), dtype=jnp.float32)

    params = init_params(key)

    out = ae_nosecond_forward(x, params)
    out = jax.block_until_ready(out)

    ref = ae_nosecond_reference(x, params)
    assert out.shape == (batch, NUMBER_SIZE)
    max_err = float(jnp.max(jnp.abs(out - ref)))
    # bf16 MXU matmuls with f32 accumulation: relaxed tolerance.
    assert jnp.allclose(out, ref, atol=2e-2, rtol=2e-2), (
        f"Pallas output mismatch, max abs err = {max_err}")

    print("KERNEL_OK")
</pallas_src>

<mosaic_0001>
module attributes {stable_mosaic.version = 11 : i64} {
  func.func @_ae_kernel(%arg0: i32, %arg1: memref<8x128xf32, #tpu.memory_space<vmem>>, %arg2: memref<96x40xf32, #tpu.memory_space<vmem>>, %arg3: memref<96x1xf32, #tpu.memory_space<vmem>>, %arg4: memref<8x128xf32, #tpu.memory_space<vmem>>) attributes {dimension_semantics = [#tpu.dimension_semantics<parallel>], iteration_bounds = array<i64: 1>, scalar_prefetch = 0 : i64, scratch_operands = 0 : i64, tpu.core_type = #tpu.core_type<tc>, window_params = [{transform_indices = @transform_0, window_bounds = array<i64: 8, 128>}, {pipeline_mode = #tpu.pipeline_mode<synchronous>, transform_indices = @transform_1, window_bounds = array<i64: 96, 40>}, {pipeline_mode = #tpu.pipeline_mode<synchronous>, transform_indices = @transform_2, window_bounds = array<i64: 96, 1>}, {transform_indices = @transform_3, window_bounds = array<i64: 8, 128>}]} {
    %c0 = arith.constant 0 : index
    %c0_0 = arith.constant 0 : index
    %0 = vector.load %arg1[%c0, %c0_0] : memref<8x128xf32, #tpu.memory_space<vmem>>, vector<8x128xf32>
    %c0_1 = arith.constant 0 : index
    %c0_2 = arith.constant 0 : index
    %1 = vector.load %arg2[%c0_1, %c0_2] : memref<96x40xf32, #tpu.memory_space<vmem>>, vector<4x8xf32>
    %2 = arith.truncf %1 : vector<4x8xf32> to vector<4x8xbf16>
    %c0_3 = arith.constant 0 : index
    %c0_4 = arith.constant 0 : index
    %3 = vector.load %arg3[%c0_3, %c0_4] : memref<96x1xf32, #tpu.memory_space<vmem>>, vector<4x1xf32>
    %4 = arith.truncf %0 : vector<8x128xf32> to vector<8x128xbf16>
    %cst = arith.constant dense<0.000000e+00> : vector<4x128xf32>
    %5 = tpu.matmul %2, %4, %cst {dimension_numbers = #tpu.dot_dimension_numbers<[1], [0], [0], [1], [0, 0, 1, 1], [], []>} : vector<4x8xbf16>, vector<8x128xbf16>, vector<4x128xf32> -> vector<4x128xf32>
    %6 = vector.broadcast %3 : vector<4x1xf32> to vector<4x128xf32>
    %7 = arith.addf %5, %6 : vector<4x128xf32>
    %cst_5 = arith.constant 0.000000e+00 : f32
    %8 = vector.broadcast %cst_5 : f32 to vector<4x128xf32>
    %9 = arith.maximumf %7, %8 : vector<4x128xf32>
    %c8 = arith.constant 8 : index
    %c0_6 = arith.constant 0 : index
    %10 = vector.load %arg2[%c8, %c0_6] : memref<96x40xf32, #tpu.memory_space<vmem>>, vector<2x4xf32>
    %11 = arith.truncf %10 : vector<2x4xf32> to vector<2x4xbf16>
    %c8_7 = arith.constant 8 : index
    %c0_8 = arith.constant 0 : index
    %12 = vector.load %arg3[%c8_7, %c0_8] : memref<96x1xf32, #tpu.memory_space<vmem>>, vector<2x1xf32>
    %13 = arith.truncf %9 : vector<4x128xf32> to vector<4x128xbf16>
    %cst_9 = arith.constant dense<0.000000e+00> : vector<2x128xf32>
    %14 = tpu.matmul %11, %13, %cst_9 {dimension_numbers = #tpu.dot_dimension_numbers<[1], [0], [0], [1], [0, 0, 1, 1], [], []>} : vector<2x4xbf16>, vector<4x128xbf16>, vector<2x128xf32> -> vector<2x128xf32>
    %15 = vector.broadcast %12 : vector<2x1xf32> to vector<2x128xf32>
    %16 = arith.addf %14, %15 : vector<2x128xf32>
    %cst_10 = arith.constant 0.000000e+00 : f32
    %17 = vector.broadcast %cst_10 : f32 to vector<2x128xf32>
    %18 = arith.maximumf %16, %17 : vector<2x128xf32>
    %c16 = arith.constant 16 : index
    %c0_11 = arith.constant 0 : index
    %19 = vector.load %arg2[%c16, %c0_11] : memref<96x40xf32, #tpu.memory_space<vmem>>, vector<20x2xf32>
    %20 = arith.truncf %19 : vector<20x2xf32> to vector<20x2xbf16>
    %c16_12 = arith.constant 16 : index
    %c0_13 = arith.constant 0 : index
    %21 = vector.load %arg3[%c16_12, %c0_13] : memref<96x1xf32, #tpu.memory_space<vmem>>, vector<20x1xf32>
    %22 = arith.truncf %18 : vector<2x128xf32> to vector<2x128xbf16>
    %cst_14 = arith.constant dense<0.000000e+00> : vector<20x128xf32>
    %23 = tpu.matmul %20, %22, %cst_14 {dimension_numbers = #tpu.dot_dimension_numbers<[1], [0], [0], [1], [0, 0, 1, 1], [], []>} : vector<20x2xbf16>, vector<2x128xbf16>, vector<20x128xf32> -> vector<20x128xf32>
    %24 = vector.broadcast %21 : vector<20x1xf32> to vector<20x128xf32>
    %25 = arith.addf %23, %24 : vector<20x128xf32>
    %cst_15 = arith.constant 0.000000e+00 : f32
    %26 = vector.broadcast %cst_15 : f32 to vector<20x128xf32>
    %27 = arith.maximumf %25, %26 : vector<20x128xf32>
    %c40 = arith.constant 40 : index
    %c0_16 = arith.constant 0 : index
    %28 = vector.load %arg2[%c40, %c0_16] : memref<96x40xf32, #tpu.memory_space<vmem>>, vector<40x20xf32>
    %29 = arith.truncf %28 : vector<40x20xf32> to vector<40x20xbf16>
    %c40_17 = arith.constant 40 : index
    %c0_18 = arith.constant 0 : index
    %30 = vector.load %arg3[%c40_17, %c0_18] : memref<96x1xf32, #tpu.memory_space<vmem>>, vector<40x1xf32>
    %31 = arith.truncf %27 : vector<20x128xf32> to vector<20x128xbf16>
    %cst_19 = arith.constant dense<0.000000e+00> : vector<40x128xf32>
    %32 = tpu.matmul %29, %31, %cst_19 {dimension_numbers = #tpu.dot_dimension_numbers<[1], [0], [0], [1], [0, 0, 1, 1], [], []>} : vector<40x20xbf16>, vector<20x128xbf16>, vector<40x128xf32> -> vector<40x128xf32>
    %33 = vector.broadcast %30 : vector<40x1xf32> to vector<40x128xf32>
    %34 = arith.addf %32, %33 : vector<40x128xf32>
    %cst_20 = arith.constant 0.000000e+00 : f32
    %35 = vector.broadcast %cst_20 : f32 to vector<40x128xf32>
    %36 = arith.maximumf %34, %35 : vector<40x128xf32>
    %c80 = arith.constant 80 : index
    %c0_21 = arith.constant 0 : index
    %37 = vector.load %arg2[%c80, %c0_21] : memref<96x40xf32, #tpu.memory_space<vmem>>, vector<4x40xf32>
    %38 = arith.truncf %37 : vector<4x40xf32> to vector<4x40xbf16>
    %c80_22 = arith.constant 80 : index
    %c0_23 = arith.constant 0 : index
    %39 = vector.load %arg3[%c80_22, %c0_23] : memref<96x1xf32, #tpu.memory_space<vmem>>, vector<4x1xf32>
    %40 = arith.truncf %36 : vector<40x128xf32> to vector<40x128xbf16>
    %cst_24 = arith.constant dense<0.000000e+00> : vector<4x128xf32>
    %41 = tpu.matmul %38, %40, %cst_24 {dimension_numbers = #tpu.dot_dimension_numbers<[1], [0], [0], [1], [0, 0, 1, 1], [], []>} : vector<4x40xbf16>, vector<40x128xbf16>, vector<4x128xf32> -> vector<4x128xf32>
    %42 = vector.broadcast %39 : vector<4x1xf32> to vector<4x128xf32>
    %43 = arith.addf %41, %42 : vector<4x128xf32>
    %cst_25 = arith.constant 0.000000e+00 : f32
    %44 = vector.broadcast %cst_25 : f32 to vector<4x128xf32>
    %45 = arith.maximumf %43, %44 : vector<4x128xf32>
    %c88 = arith.constant 88 : index
    %c0_26 = arith.constant 0 : index
    %46 = vector.load %arg2[%c88, %c0_26] : memref<96x40xf32, #tpu.memory_space<vmem>>, vector<8x4xf32>
    %47 = arith.truncf %46 : vector<8x4xf32> to vector<8x4xbf16>
    %c88_27 = arith.constant 88 : index
    %c0_28 = arith.constant 0 : index
    %48 = vector.load %arg3[%c88_27, %c0_28] : memref<96x1xf32, #tpu.memory_space<vmem>>, vector<8x1xf32>
    %49 = arith.truncf %45 : vector<4x128xf32> to vector<4x128xbf16>
    %cst_29 = arith.constant dense<0.000000e+00> : vector<8x128xf32>
    %50 = tpu.matmul %47, %49, %cst_29 {dimension_numbers = #tpu.dot_dimension_numbers<[1], [0], [0], [1], [0, 0, 1, 1], [], []>} : vector<8x4xbf16>, vector<4x128xbf16>, vector<8x128xf32> -> vector<8x128xf32>
    %51 = vector.broadcast %48 : vector<8x1xf32> to vector<8x128xf32>
    %52 = arith.addf %50, %51 : vector<8x128xf32>
    %c0_30 = arith.constant 0 : index
    %c0_31 = arith.constant 0 : index
    %53 = vector.load %arg4[%c0_30, %c0_31] : memref<8x128xf32, #tpu.memory_space<vmem>>, vector<8x128xf32>
    tpu.vector_store %arg4[%c0_30, %c0_31], %52 {strides = array<i32>} : memref<8x128xf32, #tpu.memory_space<vmem>>, vector<8x128xf32>,
    return
  }
  func.func @transform_0(%arg0: i32) -> (i32, i32) {
    %c0_i32 = arith.constant 0 : i32
    %c0_i32_0 = arith.constant 0 : i32
    return %c0_i32, %arg0 : i32, i32
  }
  func.func @transform_1(%arg0: i32) -> (i32, i32) {
    %c0_i32 = arith.constant 0 : i32
    %c0_i32_0 = arith.constant 0 : i32
    %c0_i32_1 = arith.constant 0 : i32
    return %c0_i32, %c0_i32_0 : i32, i32
  }
  func.func @transform_2(%arg0: i32) -> (i32, i32) {
    %c0_i32 = arith.constant 0 : i32
    %c0_i32_0 = arith.constant 0 : i32
    %c0_i32_1 = arith.constant 0 : i32
    return %c0_i32, %c0_i32_0 : i32, i32
  }
  func.func @transform_3(%arg0: i32) -> (i32, i32) {
    %c0_i32 = arith.constant 0 : i32
    %c0_i32_0 = arith.constant 0 : i32
    return %c0_i32, %arg0 : i32, i32
  }
}

</mosaic_0001>

<llo_original>
// kernel: ae_nosecond_forward.1
$region0: #{ae_nosecond_forward.1}
  #allocation0 [shape = 'u32[]', space=smem, size = 0x4, offset = 0x4, fixed_abs, tag = 'smem constant byte address 0x4 - core index']
  #allocation1 [shape = 'u32[144,128]{1,0:T(1,128)}', space=vmem, size = 0x12000, scoped, tag = 'internal scratch']
  %s0 = inlined_call_operand.vmem [shape: f32[8,128], index: 0, kind: input, shape index: {}]
  %s1 = inlined_call_operand.vmem [shape: f32[96,40], index: 1, kind: input, shape index: {}]
  %s2 = inlined_call_operand.vmem [shape: f32[96,1], index: 2, kind: input, shape index: {}]
  %s3 = inlined_call_operand.vmem [shape: f32[8,128], index: 3, kind: output, shape index: {}]
  %s4 = sld [smem:[#allocation0]]
  $region22: #{ae_nosecond_forward.1} parent=0
    _
  %s6 = ssub.s32 1, %s4
  %s7 = scalar_select 0, %s6, %s4
  // Predicated region
  $region2: #{ae_nosecond_forward.1} parent=0 // pred_check
    _
  $region3: #{ae_nosecond_forward.1} parent=0 // pred_check_branch
    %9 = sbr.rel (0) target = $region5
  $region4: #{ae_nosecond_forward.1} parent=0 // pred_region
    _
  $region5: #{ae_nosecond_forward.1} parent=0 // pred_fallthru
    _
  // Predicated region
  $region6: #{ae_nosecond_forward.1} parent=0 // pred_check
    _
  $region7: #{ae_nosecond_forward.1} parent=0 // pred_check_branch
    %11 = sbr.rel (0) target = $region9
  $region8: #{ae_nosecond_forward.1} parent=0 // pred_region
    _
  $region9: #{ae_nosecond_forward.1} parent=0 // pred_fallthru
    _
  // Predicated region
  $region10: #{ae_nosecond_forward.1} parent=0 // pred_check
    _
  $region11: #{ae_nosecond_forward.1} parent=0 // pred_check_branch
    %13 = sbr.rel (0) target = $region13
  $region12: #{ae_nosecond_forward.1} parent=0 // pred_region
    _
  $region13: #{ae_nosecond_forward.1} parent=0 // pred_fallthru
    _
  %v15 = vld [vmem:[%s0] sm:$0xff]
  %v16 = vld [vmem:[%s1] sm:$0xf]
  %v17 = vpack.c.bf16 %v16, %v16
  %v18 = vld [vmem:[%s2] sm:$0xf]
  %v19 = vpack.c.bf16 %v15, %v15
  %21 = vset.pattern.permute.xlu0 0
  %22 = vperm.xlu0 %21, %v18
  %v23 = vpop.permute.xlu0 %22
  %vm25 = vcmask 64512
  %v27 = vsel %vm25, %v17, 0
  %vm29 = vcmask 1043456
  %v31 = vsel %vm29, %v19, 0
  %33 = vmatprep.subr.bf16.mxu0 0
  %34 = vmatpush1.bf16.msra.mxu0 0
  %35 = vmatprep.subr.bf16.mxu0 0
  %36 = vmatpush1.bf16.msra.mxu0 0
  %37 = vmatprep.subr.bf16.mxu0 0
  %38 = vmatpush1.bf16.msra.mxu0 0
  %39 = vmatprep.subr.bf16.mxu0 0
  %40 = vmatpush1.bf16.msra.mxu0 0
  %41 = vmatprep.subr.bf16.mxu0 0
  %42 = vmatpush1.bf16.msra.mxu0 0
  %43 = vmatprep.subr.bf16.mxu0 0
  %44 = vmatpush1.bf16.msra.mxu0 0
  %45 = vmatprep.subr.bf16.mxu0 0
  %46 = vmatpush1.bf16.msra.mxu0 0
  %47 = vmatprep.subr.bf16.mxu0 0
  %48 = vmatpush1.bf16.msra.mxu0 %v31
  %49 = vmatprep.subr.bf16.mxu0 0
  %50 = vmatpush2.bf16.msra.mxu0 0
  %51 = vmatprep.subr.bf16.mxu0 0
  %52 = vmatpush2.bf16.msra.mxu0 0
  %53 = vmatprep.subr.bf16.mxu0 0
  %54 = vmatpush2.bf16.msra.mxu0 0
  %55 = vmatprep.subr.bf16.mxu0 0
  %56 = vmatpush2.bf16.msra.mxu0 0
  %57 = vmatprep.subr.bf16.mxu0 0
  %58 = vmatpush2.bf16.msra.mxu0 0
  %59 = vmatprep.subr.bf16.mxu0 0
  %60 = vmatpush2.bf16.msra.mxu0 0
  %61 = vmatprep.subr.bf16.mxu0 0
  %62 = vmatpush2.bf16.msra.mxu0 0
  %63 = vmatprep.subr.bf16.mxu0 0
  %64 = vmatpush2.bf16.msra.mxu0 0
  %65 = vmatprep.mubr.bf16.mxu0 0
  %66 = vmatmul.mubr.bf16.gmra.mxu0 %v27
  %v67 = vpop.f32.mrf.mxu0
  %v68 = vadd.f32 %v23, %v67
  %v69 = vpop.f32.mrf.mxu0
  %v70 = vpop.f32.mrf.mxu0
  %v71 = vpop.f32.mrf.mxu0
  %72 = vdwg.mxu0
  %v73 = vmax.f32 %v68, 0.0
  %v74 = vld [vmem:[%s1 + $0x8] sm:$0x3]
  %v75 = vpack.c.bf16 %v74, %v74
  %v76 = vld [vmem:[%s2 + $0x8] sm:$0x3]
  %v77 = vpack.c.bf16 %v73, %v73
  %79 = vset.pattern.permute.xlu0 0
  %80 = vperm.xlu0 %79, %v76
  %v81 = vpop.permute.xlu0 %80
  %vm83 = vcmask 31744
  %v85 = vsel %vm83, %v75, 0
  %vm87 = vcmask 1041408
  %v89 = vsel %vm87, %v77, 0
  %91 = vmatprep.subr.bf16.mxu0 0
  %92 = vmatpush1.bf16.msra.mxu0 0
  %93 = vmatprep.subr.bf16.mxu0 0
  %94 = vmatpush1.bf16.msra.mxu0 0
  %95 = vmatprep.subr.bf16.mxu0 0
  %96 = vmatpush1.bf16.msra.mxu0 0
  %97 = vmatprep.subr.bf16.mxu0 0
  %98 = vmatpush1.bf16.msra.mxu0 0
  %99 = vmatprep.subr.bf16.mxu0 0
  %100 = vmatpush1.bf16.msra.mxu0 0
  %101 = vmatprep.subr.bf16.mxu0 0
  %102 = vmatpush1.bf16.msra.mxu0 0
  %103 = vmatprep.subr.bf16.mxu0 0
  %104 = vmatpush1.bf16.msra.mxu0 0
  %105 = vmatprep.subr.bf16.mxu0 0
  %106 = vmatpush1.bf16.msra.mxu0 %v89
  %107 = vmatprep.subr.bf16.mxu0 0
  %108 = vmatpush2.bf16.msra.mxu0 0
  %109 = vmatprep.subr.bf16.mxu0 0
  %110 = vmatpush2.bf16.msra.mxu0 0
  %111 = vmatprep.subr.bf16.mxu0 0
  %112 = vmatpush2.bf16.msra.mxu0 0
  %113 = vmatprep.subr.bf16.mxu0 0
  %114 = vmatpush2.bf16.msra.mxu0 0
  %115 = vmatprep.subr.bf16.mxu0 0
  %116 = vmatpush2.bf16.msra.mxu0 0
  %117 = vmatprep.subr.bf16.mxu0 0
  %118 = vmatpush2.bf16.msra.mxu0 0
  %119 = vmatprep.subr.bf16.mxu0 0
  %120 = vmatpush2.bf16.msra.mxu0 0
  %121 = vmatprep.subr.bf16.mxu0 0
  %122 = vmatpush2.bf16.msra.mxu0 0
  %123 = vmatprep.mubr.bf16.mxu0 0
  %124 = vmatmul.mubr.bf16.gmra.mxu0 %v85
  %v125 = vpop.f32.mrf.mxu0
  %v126 = vadd.f32 %v81, %v125
  %v127 = vpop.f32.mrf.mxu0
  %v128 = vpop.f32.mrf.mxu0
  %v129 = vpop.f32.mrf.mxu0
  %130 = vdwg.mxu0
  %v131 = vmax.f32 %v126, 0.0
  %v132 = vld [vmem:[%s1 + $0x10] sm:$0xff]
  %v133 = vld [vmem:[%s1 + $0x18] sm:$0xff]
  %v134 = vld [vmem:[%s1 + $0x20] sm:$0xf]
  %v135 = vpack.c.bf16 %v133, %v132
  %v136 = vpack.c.bf16 %v134, %v134
  %v137 = vld [vmem:[%s2 + $0x10] sm:$0xff]
  %v138 = vld [vmem:[%s2 + $0x18] sm:$0xff]
  %v139 = vld [vmem:[%s2 + $0x20] sm:$0xf]
  %v140 = vpack.c.bf16 %v131, %v131
  %142 = vset.pattern.permute.xlu0 0
  %143 = vperm.xlu0 %142, %v137
  %v144 = vpop.permute.xlu0 %143
  %147 = vset.pattern.permute.xlu0 0
  %148 = vperm.xlu0 %147, %v138
  %v149 = vpop.permute.xlu0 %148
  %152 = vset.pattern.permute.xlu0 0
  %153 = vperm.xlu0 %152, %v139
  %v154 = vpop.permute.xlu0 %153
  %vm156 = vcmask 15360
  %v158 = vsel %vm156, %v135, 0
  %v161 = vsel %vm156, %v136, 0
  %vm163 = vcmask 1040384
  %v165 = vsel %vm163, %v140, 0
  %167 = vmatprep.subr.bf16.mxu0 0
  %168 = vmatpush1.bf16.msra.mxu0 0
  %169 = vmatprep.subr.bf16.mxu0 0
  %170 = vmatpush1.bf16.msra.mxu0 0
  %171 = vmatprep.subr.bf16.mxu0 0
  %172 = vmatpush1.bf16.msra.mxu0 0
  %173 = vmatprep.subr.bf16.mxu0 0
  %174 = vmatpush1.bf16.msra.mxu0 0
  %175 = vmatprep.subr.bf16.mxu0 0
  %176 = vmatpush1.bf16.msra.mxu0 0
  %177 = vmatprep.subr.bf16.mxu0 0
  %178 = vmatpush1.bf16.msra.mxu0 0
  %179 = vmatprep.subr.bf16.mxu0 0
  %180 = vmatpush1.bf16.msra.mxu0 0
  %181 = vmatprep.subr.bf16.mxu0 0
  %182 = vmatpush1.bf16.msra.mxu0 %v165
  %183 = vmatprep.subr.bf16.mxu0 0
  %184 = vmatpush2.bf16.msra.mxu0 0
  %185 = vmatprep.subr.bf16.mxu0 0
  %186 = vmatpush2.bf16.msra.mxu0 0
  %187 = vmatprep.subr.bf16.mxu0 0
  %188 = vmatpush2.bf16.msra.mxu0 0
  %189 = vmatprep.subr.bf16.mxu0 0
  %190 = vmatpush2.bf16.msra.mxu0 0
  %191 = vmatprep.subr.bf16.mxu0 0
  %192 = vmatpush2.bf16.msra.mxu0 0
  %193 = vmatprep.subr.bf16.mxu0 0
  %194 = vmatpush2.bf16.msra.mxu0 0
  %195 = vmatprep.subr.bf16.mxu0 0
  %196 = vmatpush2.bf16.msra.mxu0 0
  %197 = vmatprep.subr.bf16.mxu0 0
  %198 = vmatpush2.bf16.msra.mxu0 0
  %199 = vmatprep.mubr.bf16.mxu0 0
  %200 = vmatmul.mubr.bf16.gmra.mxu0 %v158
  %v201 = vpop.f32.mrf.mxu0
  %v202 = vadd.f32 %v144, %v201
  %v203 = vpop.f32.mrf.mxu0
  %v204 = vpop.f32.mrf.mxu0
  %v205 = vadd.f32 %v149, %v204
  %v206 = vpop.f32.mrf.mxu0
  %207 = vmatprep.mubr.bf16.mxu0 0
  %208 = vmatmul.mubr.bf16.gmra.mxu0 %v161
  %v209 = vpop.f32.mrf.mxu0
  %v210 = vadd.f32 %v154, %v209
  %v211 = vpop.f32.mrf.mxu0
  %v212 = vpop.f32.mrf.mxu0
  %v213 = vpop.f32.mrf.mxu0
  %214 = vdwg.mxu0
  %v215 = vmax.f32 %v202, 0.0
  %v216 = vmax.f32 %v205, 0.0
  %v217 = vmax.f32 %v210, 0.0
  %v218 = vld [vmem:[%s1 + $0x28] sm:$0xff]
  %v219 = vld [vmem:[%s1 + $0x30] sm:$0xff]
  %v220 = vld [vmem:[%s1 + $0x38] sm:$0xff]
  %v221 = vld [vmem:[%s1 + $0x40] sm:$0xff]
  %v222 = vld [vmem:[%s1 + $0x48] sm:$0xff]
  %v223 = vpack.c.bf16 %v219, %v218
  %v224 = vpack.c.bf16 %v221, %v220
  %v225 = vpack.c.bf16 %v222, %v222
  %v226 = vld [vmem:[%s2 + $0x28] sm:$0xff]
  %v227 = vld [vmem:[%s2 + $0x30] sm:$0xff]
  %v228 = vld [vmem:[%s2 + $0x38] sm:$0xff]
  %v229 = vld [vmem:[%s2 + $0x40] sm:$0xff]
  %v230 = vld [vmem:[%s2 + $0x48] sm:$0xff]
  %v231 = vpack.c.bf16 %v216, %v215
  %v232 = vpack.c.bf16 %v217, %v217
  %234 = vset.pattern.permute.xlu0 0
  %235 = vperm.xlu0 %234, %v226
  %v236 = vpop.permute.xlu0 %235
  %239 = vset.pattern.permute.xlu0 0
  %240 = vperm.xlu0 %239, %v227
  %v241 = vpop.permute.xlu0 %240
  %244 = vset.pattern.permute.xlu0 0
  %245 = vperm.xlu0 %244, %v228
  %v246 = vpop.permute.xlu0 %245
  %249 = vset.pattern.permute.xlu0 0
  %250 = vperm.xlu0 %249, %v229
  %v251 = vpop.permute.xlu0 %250
  %254 = vset.pattern.permute.xlu0 0
  %255 = vperm.xlu0 %254, %v230
  %v256 = vpop.permute.xlu0 %255
  %vm258 = vcmask 162816
  %v260 = vsel %vm258, %v223, 0
  %v263 = vsel %vm258, %v224, 0
  %v266 = vsel %vm258, %v225, 0
  %v269 = vsel %vm87, %v232, 0
  %271 = vmatprep.subr.bf16.mxu0 0
  %272 = vmatpush1.bf16.msra.mxu0 0
  %273 = vmatprep.subr.bf16.mxu0 0
  %274 = vmatpush1.bf16.msra.mxu0 0
  %275 = vmatprep.subr.bf16.mxu0 0
  %276 = vmatpush1.bf16.msra.mxu0 0
  %277 = vmatprep.subr.bf16.mxu0 0
  %278 = vmatpush1.bf16.msra.mxu0 0
  %279 = vmatprep.subr.bf16.mxu0 0
  %280 = vmatpush1.bf16.msra.mxu0 0
  %281 = vmatprep.subr.bf16.mxu0 0
  %282 = vmatpush1.bf16.msra.mxu0 0
  %283 = vmatprep.subr.bf16.mxu0 0
  %284 = vmatpush1.bf16.msra.mxu0 %v269
  %285 = vmatprep.subr.bf16.mxu0 0
  %286 = vmatpush1.bf16.msra.mxu0 %v231
  %287 = vmatprep.subr.bf16.mxu0 0
  %288 = vmatpush2.bf16.msra.mxu0 0
  %289 = vmatprep.subr.bf16.mxu0 0
  %290 = vmatpush2.bf16.msra.mxu0 0
  %291 = vmatprep.subr.bf16.mxu0 0
  %292 = vmatpush2.bf16.msra.mxu0 0
  %293 = vmatprep.subr.bf16.mxu0 0
  %294 = vmatpush2.bf16.msra.mxu0 0
  %295 = vmatprep.subr.bf16.mxu0 0
  %296 = vmatpush2.bf16.msra.mxu0 0
  %297 = vmatprep.subr.bf16.mxu0 0
  %298 = vmatpush2.bf16.msra.mxu0 0
  %299 = vmatprep.subr.bf16.mxu0 0
  %300 = vmatpush2.bf16.msra.mxu0 0
  %301 = vmatprep.subr.bf16.mxu0 0
  %302 = vmatpush2.bf16.msra.mxu0 0
  %303 = vmatprep.mubr.bf16.mxu0 0
  %304 = vmatmul.mubr.bf16.gmra.mxu0 %v260
  %v305 = vpop.f32.mrf.mxu0
  %v306 = vadd.f32 %v236, %v305
  %v307 = vpop.f32.mrf.mxu0
  %v308 = vpop.f32.mrf.mxu0
  %v309 = vadd.f32 %v241, %v308
  %v310 = vpop.f32.mrf.mxu0
  %311 = vmatprep.mubr.bf16.mxu0 0
  %312 = vmatmul.mubr.bf16.gmra.mxu0 %v263
  %v313 = vpop.f32.mrf.mxu0
  %v314 = vadd.f32 %v246, %v313
  %v315 = vpop.f32.mrf.mxu0
  %v316 = vpop.f32.mrf.mxu0
  %v317 = vadd.f32 %v251, %v316
  %v318 = vpop.f32.mrf.mxu0
  %319 = vmatprep.mubr.bf16.mxu0 0
  %320 = vmatmul.mubr.bf16.gmra.mxu0 %v266
  %v321 = vpop.f32.mrf.mxu0
  %v322 = vadd.f32 %v256, %v321
  %v323 = vpop.f32.mrf.mxu0
  %v324 = vpop.f32.mrf.mxu0
  %v325 = vpop.f32.mrf.mxu0
  %326 = vdwg.mxu0
  %v327 = vmax.f32 %v306, 0.0
  %v328 = vmax.f32 %v309, 0.0
  %v329 = vmax.f32 %v314, 0.0
  %v330 = vmax.f32 %v317, 0.0
  %v331 = vmax.f32 %v322, 0.0
  %v332 = vld [vmem:[%s1 + $0x50] sm:$0xf]
  %v333 = vpack.c.bf16 %v332, %v332
  %v334 = vld [vmem:[%s2 + $0x50] sm:$0xf]
  %v335 = vpack.c.bf16 %v328, %v327
  %v336 = vpack.c.bf16 %v330, %v329
  %v337 = vpack.c.bf16 %v331, %v331
  %339 = vset.pattern.permute.xlu0 0
  %340 = vperm.xlu0 %339, %v334
  %v341 = vpop.permute.xlu0 %340
  %vm343 = vcmask 326656
  %v345 = vsel %vm343, %v333, 0
  %v348 = vsel %vm29, %v337, 0
  %350 = vmatprep.subr.bf16.mxu0 0
  %351 = vmatpush1.bf16.msra.mxu0 0
  %352 = vmatprep.subr.bf16.mxu0 0
  %353 = vmatpush1.bf16.msra.mxu0 0
  %354 = vmatprep.subr.bf16.mxu0 0
  %355 = vmatpush1.bf16.msra.mxu0 0
  %356 = vmatprep.subr.bf16.mxu0 0
  %357 = vmatpush1.bf16.msra.mxu0 0
  %358 = vmatprep.subr.bf16.mxu0 0
  %359 = vmatpush1.bf16.msra.mxu0 0
  %360 = vmatprep.subr.bf16.mxu0 0
  %361 = vmatpush1.bf16.msra.mxu0 %v348
  %362 = vmatprep.subr.bf16.mxu0 0
  %363 = vmatpush1.bf16.msra.mxu0 %v336
  %364 = vmatprep.subr.bf16.mxu0 0
  %365 = vmatpush1.bf16.msra.mxu0 %v335
  %366 = vmatprep.subr.bf16.mxu0 0
  %367 = vmatpush2.bf16.msra.mxu0 0
  %368 = vmatprep.subr.bf16.mxu0 0
  %369 = vmatpush2.bf16.msra.mxu0 0
  %370 = vmatprep.subr.bf16.mxu0 0
  %371 = vmatpush2.bf16.msra.mxu0 0
  %372 = vmatprep.subr.bf16.mxu0 0
  %373 = vmatpush2.bf16.msra.mxu0 0
  %374 = vmatprep.subr.bf16.mxu0 0
  %375 = vmatpush2.bf16.msra.mxu0 0
  %376 = vmatprep.subr.bf16.mxu0 0
  %377 = vmatpush2.bf16.msra.mxu0 0
  %378 = vmatprep.subr.bf16.mxu0 0
  %379 = vmatpush2.bf16.msra.mxu0 0
  %380 = vmatprep.subr.bf16.mxu0 0
  %381 = vmatpush2.bf16.msra.mxu0 0
  %382 = vmatprep.mubr.bf16.mxu0 0
  %383 = vmatmul.mubr.bf16.gmra.mxu0 %v345
  %v384 = vpop.f32.mrf.mxu0
  %v385 = vadd.f32 %v341, %v384
  %v386 = vpop.f32.mrf.mxu0
  %v387 = vpop.f32.mrf.mxu0
  %v388 = vpop.f32.mrf.mxu0
  %389 = vdwg.mxu0
  %v390 = vmax.f32 %v385, 0.0
  %v391 = vld [vmem:[%s1 + $0x58] sm:$0xff]
  %v392 = vpack.c.bf16 %v391, %v391
  %v393 = vld [vmem:[%s2 + $0x58] sm:$0xff]
  %v394 = vpack.c.bf16 %v390, %v390
  %396 = vset.pattern.permute.xlu0 0
  %397 = vperm.xlu0 %396, %v393
  %v398 = vpop.permute.xlu0 %397
  %v401 = vsel %vm83, %v392, 0
  %v404 = vsel %vm87, %v394, 0
  %406 = vmatprep.subr.bf16.mxu0 0
  %407 = vmatpush1.bf16.msra.mxu0 0
  %408 = vmatprep.subr.bf16.mxu0 0
  %409 = vmatpush1.bf16.msra.mxu0 0
  %410 = vmatprep.subr.bf16.mxu0 0
  %411 = vmatpush1.bf16.msra.mxu0 0
  %412 = vmatprep.subr.bf16.mxu0 0
  %413 = vmatpush1.bf16.msra.mxu0 0
  %414 = vmatprep.subr.bf16.mxu0 0
  %415 = vmatpush1.bf16.msra.mxu0 0
  %416 = vmatprep.subr.bf16.mxu0 0
  %417 = vmatpush1.bf16.msra.mxu0 0
  %418 = vmatprep.subr.bf16.mxu0 0
  %419 = vmatpush1.bf16.msra.mxu0 0
  %420 = vmatprep.subr.bf16.mxu0 0
  %421 = vmatpush1.bf16.msra.mxu0 %v404
  %422 = vmatprep.subr.bf16.mxu0 0
  %423 = vmatpush2.bf16.msra.mxu0 0
  %424 = vmatprep.subr.bf16.mxu0 0
  %425 = vmatpush2.bf16.msra.mxu0 0
  %426 = vmatprep.subr.bf16.mxu0 0
  %427 = vmatpush2.bf16.msra.mxu0 0
  %428 = vmatprep.subr.bf16.mxu0 0
  %429 = vmatpush2.bf16.msra.mxu0 0
  %430 = vmatprep.subr.bf16.mxu0 0
  %431 = vmatpush2.bf16.msra.mxu0 0
  %432 = vmatprep.subr.bf16.mxu0 0
  %433 = vmatpush2.bf16.msra.mxu0 0
  %434 = vmatprep.subr.bf16.mxu0 0
  %435 = vmatpush2.bf16.msra.mxu0 0
  %436 = vmatprep.subr.bf16.mxu0 0
  %437 = vmatpush2.bf16.msra.mxu0 0
  %438 = vmatprep.mubr.bf16.mxu0 0
  %439 = vmatmul.mubr.bf16.gmra.mxu0 %v401
  %v440 = vpop.f32.mrf.mxu0
  %v441 = vadd.f32 %v398, %v440
  %v442 = vpop.f32.mrf.mxu0
  %v443 = vpop.f32.mrf.mxu0
  %v444 = vpop.f32.mrf.mxu0
  %445 = vdwg.mxu0
  %446 = vst [vmem:[%s3] sm:$0xff] %v441
  // Predicated region
  $region14: #{ae_nosecond_forward.1} parent=0 // pred_check
    _
  $region15: #{ae_nosecond_forward.1} parent=0 // pred_check_branch
    %448 = sbr.rel (0) target = $region17
  $region16: #{ae_nosecond_forward.1} parent=0 // pred_region
    _
  $region17: #{ae_nosecond_forward.1} parent=0 // pred_fallthru
    _
  // Predicated region
  $region18: #{ae_nosecond_forward.1} parent=0 // pred_check
    _
  $region19: #{ae_nosecond_forward.1} parent=0 // pred_check_branch
    %450 = sbr.rel (0) target = $region21
  $region20: #{ae_nosecond_forward.1} parent=0 // pred_region
    _
  $region21: #{ae_nosecond_forward.1} parent=0 // pred_fallthru
    _

</llo_original>
